<compile_context>
chip_gen: v5e
topology: v5e:2x2
jax: 0.10.0
libtpu: 0.0.40
codegen_flags: <defaults>
</compile_context>

<pallas_src>
import jax
import jax.numpy as jnp
from jax.experimental import pallas as pl
from jax.experimental.pallas import tpu as pltpu


_SMALL_D_MAX = 16   # below this, compute the x.e dot on the VPU, not the MXU


def _vq_kernel(x_ref, cb_ref, cbt_ref, e2_ref, q_ref, idx_ref, sse_ref):
    """One (batch b, spatial tile t) step against the full codebook.

    x_ref   : (D, T)  float32  channel-major input tile (T spatial positions)
    cb_ref  : (K, D)  float32  codebook (resident every step)
    cbt_ref : (D, K)  float32  codebook transposed (resident, for the gather)
    e2_ref  : (K, 1)  float32  per-code squared norms (hoisted to the wrapper)
    q_ref   : (D, T)  float32  quantized tile (lane-dense store)
    idx_ref : (1, T)  int32    argmin indices (lane-dense store)
    sse_ref : (1, 1)  float32  per-batch running sum of squared error
    """
    t = pl.program_id(1)

    x = x_ref[...]            # (D, T)
    cb = cb_ref[...]          # (K, D)
    cbt = cbt_ref[...]        # (D, K)
    e2 = e2_ref[...]          # (K, 1)
    K, D = cb.shape

    # dots[k, j] = <e_k, x_j>.  For tiny D an MXU matmul would waste >95% of
    # the contraction width, so unroll over D on the VPU instead.
    if D <= _SMALL_D_MAX:
        dots = cb[:, 0:1] * x[0:1, :]                                 # (K, T)
        for d in range(1, D):
            dots = dots + cb[:, d:d + 1] * x[d:d + 1, :]
    else:
        dots = jnp.dot(cb, x, preferred_element_type=jnp.float32)    # MXU (K, T)

    # argmin_k ||x||^2 + ||e_k||^2 - 2 x.e_k  ==  argmin_k ||e_k||^2 - 2 x.e_k
    # (the ||x||^2 term is a per-column constant and is dropped).
    dist = e2 - 2.0 * dots                                            # (K, T)

    dmin = jnp.min(dist, axis=0, keepdims=True)                       # (1, T)
    iota_k = jax.lax.broadcasted_iota(jnp.int32, dist.shape, 0)
    # first minimum on ties, like torch.argmin
    idx = jnp.min(jnp.where(dist == dmin, iota_k, K), axis=0, keepdims=True)

    # one-hot @ codebook == embedding lookup (MXU-friendly gather)
    onehot = (iota_k == idx).astype(jnp.float32)                      # (K, T)
    quant = jnp.dot(cbt, onehot, preferred_element_type=jnp.float32)  # (D, T)

    q_ref[...] = quant.astype(q_ref.dtype)
    idx_ref[...] = idx.astype(jnp.int32)

    # sum of squared error for the MSE losses, accumulated over spatial tiles
    diff = quant - x
    tile_sse = jnp.sum(diff * diff)

    @pl.when(t == 0)
    def _():
        sse_ref[...] = jnp.zeros_like(sse_ref)

    sse_ref[...] = sse_ref[...] + tile_sse


def _pick_spatial_tile(hw, requested):
    """Largest lane-aligned (multiple-of-128) tile dividing hw, capped at
    `requested`; falls back to the full spatial row if none exists."""
    if hw <= requested:
        return hw
    t = (requested // 128) * 128
    while t >= 128:
        if hw % t == 0:
            return t
        t -= 128
    return hw


def vector_quantizer_forward(x_nchw, codebook, commitment_cost=0.25, tile_t=1024):
    """Forward pass of VectorQuantizer.

    x_nchw  : (B, C, H, W) float32, C == embedding_dim
    codebook: (num_embeddings, embedding_dim) float32
    returns : (quantized (B,C,H,W), loss scalar, encoding_indices (B,H,W) int32)
    """
    B, C, H, W = x_nchw.shape
    K, D = codebook.shape
    assert C == D, "channel dim must equal embedding_dim"
    HW = H * W

    tile_t = _pick_spatial_tile(HW, tile_t)
    num_t = HW // tile_t

    # Free reshapes only -- no NCHW<->NHWC transposes touch HBM.
    x_r = x_nchw.reshape(B, D, HW).astype(jnp.float32)    # (B, D, HW)
    cb = codebook.astype(jnp.float32)                     # (K, D)
    cbt = cb.T                                            # (D, K), tiny one-time
    e2 = jnp.sum(cb * cb, axis=1, keepdims=True)          # (K, 1), hoisted

    out_shapes = (
        jax.ShapeDtypeStruct((B, D, HW), jnp.float32),    # quantized (NCHW-flat)
        jax.ShapeDtypeStruct((B, 1, HW), jnp.int32),      # indices, lane-dense
        jax.ShapeDtypeStruct((B, 1, 1), jnp.float32),     # per-batch SSE partials
    )

    grid_spec = pltpu.PrefetchScalarGridSpec(
        num_scalar_prefetch=0,
        grid=(B, num_t),
        in_specs=[
            pl.BlockSpec((None, D, tile_t), lambda b, t: (b, 0, t)),  # x tile
            pl.BlockSpec((K, D), lambda b, t: (0, 0)),                # codebook
            pl.BlockSpec((D, K), lambda b, t: (0, 0)),                # codebook^T
            pl.BlockSpec((K, 1), lambda b, t: (0, 0)),                # ||e||^2
        ],
        out_specs=[
            pl.BlockSpec((None, D, tile_t), lambda b, t: (b, 0, t)),
            pl.BlockSpec((None, 1, tile_t), lambda b, t: (b, 0, t)),
            pl.BlockSpec((None, 1, 1), lambda b, t: (b, 0, 0)),       # resident acc
        ],
    )

    quant_r, idx_r, sse = pl.pallas_call(
        _vq_kernel,
        out_shape=out_shapes,
        grid_spec=grid_spec,
        compiler_params=pltpu.CompilerParams(
            # Batch axis is shardable across TensorCores (v7x megacore); only
            # the spatial-tile axis carries the resident SSE accumulator.
            dimension_semantics=("parallel", "arbitrary"),
            # Explicit VMEM budget: large tiles on v5e/v6e, < v7x 64 MiB.
            vmem_limit_bytes=48 * 1024 * 1024,
        ),
    )(x_r, cb, cbt, e2)

    # In the forward pass q_latent_loss == e_latent_loss == mse (the .detach()
    # calls only change gradients), so loss = (1 + beta) * mse.
    mse = jnp.sum(sse) / (B * HW * D)
    loss = (1.0 + commitment_cost) * mse

    # Straight-through estimator: forward value is the quantized tensor.
    quantized = quant_r.reshape(B, D, H, W)         # free reshape (still NCHW)
    encoding_indices = idx_r.reshape(B, H, W)       # int32 (torch returns int64)
    return quantized, loss, encoding_indices


def _reference_forward(x_nchw, codebook, commitment_cost=0.25):
    """Pure-JAX mirror of the PyTorch forward (full-precision matmul)."""
    B, C, H, W = x_nchw.shape
    inputs = jnp.transpose(x_nchw, (0, 2, 3, 1))
    flat = inputs.reshape(-1, C)
    dist = (jnp.sum(flat ** 2, axis=1, keepdims=True)
            + jnp.sum(codebook ** 2, axis=1)
            - 2.0 * jnp.matmul(flat, codebook.T,
                               precision=jax.lax.Precision.HIGHEST))
    idx = jnp.argmin(dist, axis=1)
    quant = codebook[idx].reshape(inputs.shape)
    mse = jnp.mean((quant - inputs) ** 2)
    loss = (1.0 + commitment_cost) * mse
    return (jnp.transpose(quant, (0, 3, 1, 2)), loss,
            idx.reshape(B, H, W).astype(jnp.int32))


if __name__ == "__main__":
    # module hyper-parameters (small, consistent with the nn.Module __init__)
    num_embeddings = 16
    embedding_dim = 4
    commitment_cost = 0.25

    key = jax.random.PRNGKey(0)
    k_emb, k_x = jax.random.split(key)

    # deterministic parameter init: uniform(-1/K, 1/K) like the PyTorch module
    codebook = jax.random.uniform(
        k_emb, (num_embeddings, embedding_dim), dtype=jnp.float32,
        minval=-1.0 / num_embeddings, maxval=1.0 / num_embeddings)

    # NCHW input: (batch=2, channels=embedding_dim=4, H=16, W=16)
    x = jax.random.normal(k_x, (2, embedding_dim, 16, 16), dtype=jnp.float32)

    quantized, loss, indices = vector_quantizer_forward(
        x, codebook, commitment_cost=commitment_cost)
    jax.block_until_ready((quantized, loss, indices))

    B, C, H, W = x.shape
    assert quantized.shape == (B, C, H, W)
    assert indices.shape == (B, H, W)
    assert indices.dtype == jnp.int32

    # ---- validation against a pure-JAX reference of the PyTorch forward ----
    q_ref, loss_ref, idx_ref = _reference_forward(
        x, codebook, commitment_cost=commitment_cost)

    # Exact squared distances (direct expansion, no matmul truncation) for a
    # tie-aware argmin check: the kernel drops the ||x||^2 term (argmin is
    # invariant to it), so on exact fp ties the selected index may legally
    # differ from torch.argmin while still being a true nearest code.
    flat = jnp.transpose(x, (0, 2, 3, 1)).reshape(-1, embedding_dim)
    full_dist = jnp.sum((flat[:, None, :] - codebook[None, :, :]) ** 2, axis=-1)
    ki = indices.reshape(-1).astype(jnp.int32)
    assert bool(jnp.all((ki >= 0) & (ki < num_embeddings)))
    d_chosen = jnp.take_along_axis(full_dist, ki[:, None], axis=1)[:, 0]
    d_best = jnp.min(full_dist, axis=1)
    assert bool(jnp.all(d_chosen <= d_best + 1e-4))

    # quantized rows must be exactly the selected codebook rows
    q_rows = jnp.transpose(quantized, (0, 2, 3, 1)).reshape(-1, embedding_dim)
    assert bool(jnp.allclose(q_rows, codebook[ki], atol=1e-5))

    # loss matches the reference (robust to fp-level argmin ties)
    assert bool(jnp.allclose(loss, loss_ref, rtol=1e-4, atol=1e-4))

    print("KERNEL_OK")
</pallas_src>

<mosaic_0001>
module attributes {stable_mosaic.version = 11 : i64} {
  func.func @_vq_kernel(%arg0: i32, %arg1: i32, %arg2: memref<1x4x256xf32, #tpu.memory_space<vmem>>, %arg3: memref<16x4xf32, #tpu.memory_space<vmem>>, %arg4: memref<4x16xf32, #tpu.memory_space<vmem>>, %arg5: memref<16x1xf32, #tpu.memory_space<vmem>>, %arg6: memref<1x4x256xf32, #tpu.memory_space<vmem>>, %arg7: memref<1x1x256xi32, #tpu.memory_space<vmem>>, %arg8: memref<1x1x1xf32, #tpu.memory_space<vmem>>) attributes {dimension_semantics = [#tpu.dimension_semantics<parallel>, #tpu.dimension_semantics<arbitrary>], iteration_bounds = array<i64: 2, 1>, scalar_prefetch = 0 : i64, scratch_operands = 0 : i64, tpu.core_type = #tpu.core_type<tc>, window_params = [{transform_indices = @transform_0, window_bounds = array<i64: 1, 4, 256>}, {pipeline_mode = #tpu.pipeline_mode<synchronous>, transform_indices = @transform_1, window_bounds = array<i64: 16, 4>}, {pipeline_mode = #tpu.pipeline_mode<synchronous>, transform_indices = @transform_2, window_bounds = array<i64: 4, 16>}, {pipeline_mode = #tpu.pipeline_mode<synchronous>, transform_indices = @transform_3, window_bounds = array<i64: 16, 1>}, {transform_indices = @transform_4, window_bounds = array<i64: 1, 4, 256>}, {transform_indices = @transform_5, window_bounds = array<i64: 1, 1, 256>}, {transform_indices = @transform_6, window_bounds = array<i64: 1, 1, 1>}]} {
    %c0 = arith.constant 0 : index
    %c0_0 = arith.constant 0 : index
    %c0_1 = arith.constant 0 : index
    %0 = vector.load %arg2[%c0, %c0_0, %c0_1] : memref<1x4x256xf32, #tpu.memory_space<vmem>>, vector<1x4x256xf32>
    %1 = vector.shape_cast %0 : vector<1x4x256xf32> to vector<4x256xf32>
    %c0_2 = arith.constant 0 : index
    %c0_3 = arith.constant 0 : index
    %2 = vector.load %arg3[%c0_2, %c0_3] : memref<16x4xf32, #tpu.memory_space<vmem>>, vector<16x4xf32>
    %c0_4 = arith.constant 0 : index
    %c0_5 = arith.constant 0 : index
    %3 = vector.load %arg4[%c0_4, %c0_5] : memref<4x16xf32, #tpu.memory_space<vmem>>, vector<4x16xf32>
    %c0_6 = arith.constant 0 : index
    %c0_7 = arith.constant 0 : index
    %4 = vector.load %arg5[%c0_6, %c0_7] : memref<16x1xf32, #tpu.memory_space<vmem>>, vector<16x1xf32>
    %5 = vector.extract_strided_slice %2 {offsets = [0, 0], sizes = [16, 1], strides = [1, 1]} : vector<16x4xf32> to vector<16x1xf32>
    %6 = vector.extract_strided_slice %1 {offsets = [0, 0], sizes = [1, 256], strides = [1, 1]} : vector<4x256xf32> to vector<1x256xf32>
    %7 = vector.broadcast %5 : vector<16x1xf32> to vector<16x256xf32>
    %8 = vector.broadcast %6 : vector<1x256xf32> to vector<16x256xf32>
    %9 = arith.mulf %7, %8 : vector<16x256xf32>
    %10 = vector.extract_strided_slice %2 {offsets = [0, 1], sizes = [16, 1], strides = [1, 1]} : vector<16x4xf32> to vector<16x1xf32>
    %11 = vector.extract_strided_slice %1 {offsets = [1, 0], sizes = [1, 256], strides = [1, 1]} : vector<4x256xf32> to vector<1x256xf32>
    %12 = vector.broadcast %10 : vector<16x1xf32> to vector<16x256xf32>
    %13 = vector.broadcast %11 : vector<1x256xf32> to vector<16x256xf32>
    %14 = arith.mulf %12, %13 : vector<16x256xf32>
    %15 = arith.addf %9, %14 : vector<16x256xf32>
    %16 = vector.extract_strided_slice %2 {offsets = [0, 2], sizes = [16, 1], strides = [1, 1]} : vector<16x4xf32> to vector<16x1xf32>
    %17 = vector.extract_strided_slice %1 {offsets = [2, 0], sizes = [1, 256], strides = [1, 1]} : vector<4x256xf32> to vector<1x256xf32>
    %18 = vector.broadcast %16 : vector<16x1xf32> to vector<16x256xf32>
    %19 = vector.broadcast %17 : vector<1x256xf32> to vector<16x256xf32>
    %20 = arith.mulf %18, %19 : vector<16x256xf32>
    %21 = arith.addf %15, %20 : vector<16x256xf32>
    %22 = vector.extract_strided_slice %2 {offsets = [0, 3], sizes = [16, 1], strides = [1, 1]} : vector<16x4xf32> to vector<16x1xf32>
    %23 = vector.extract_strided_slice %1 {offsets = [3, 0], sizes = [1, 256], strides = [1, 1]} : vector<4x256xf32> to vector<1x256xf32>
    %24 = vector.broadcast %22 : vector<16x1xf32> to vector<16x256xf32>
    %25 = vector.broadcast %23 : vector<1x256xf32> to vector<16x256xf32>
    %26 = arith.mulf %24, %25 : vector<16x256xf32>
    %27 = arith.addf %21, %26 : vector<16x256xf32>
    %cst = arith.constant 2.000000e+00 : f32
    %28 = vector.broadcast %cst : f32 to vector<16x256xf32>
    %29 = arith.mulf %28, %27 : vector<16x256xf32>
    %30 = vector.broadcast %4 : vector<16x1xf32> to vector<16x256xf32>
    %31 = arith.subf %30, %29 : vector<16x256xf32>
    %cst_8 = arith.constant dense<0x7F800000> : vector<256xf32>
    %32 = vector.multi_reduction <minimumf>, %31, %cst_8 [0] : vector<16x256xf32> to vector<256xf32>
    %33 = vector.shape_cast %32 : vector<256xf32> to vector<1x256xf32>
    %34 = tpu.iota {dimensions = array<i32: 0>} : vector<16x256xi32>
    %35 = vector.broadcast %33 : vector<1x256xf32> to vector<16x256xf32>
    %36 = arith.cmpf oeq, %31, %35 : vector<16x256xf32>
    %c16_i32 = arith.constant 16 : i32
    %37 = vector.broadcast %c16_i32 : i32 to vector<16x256xi32>
    %38 = arith.select %36, %34, %37 : vector<16x256xi1>, vector<16x256xi32>
    %cst_9 = arith.constant dense<2147483647> : vector<256xi32>
    %39 = vector.multi_reduction <minsi>, %38, %cst_9 [0] : vector<16x256xi32> to vector<256xi32>
    %40 = vector.shape_cast %39 : vector<256xi32> to vector<1x256xi32>
    %41 = vector.broadcast %40 : vector<1x256xi32> to vector<16x256xi32>
    %42 = arith.cmpi eq, %34, %41 : vector<16x256xi32>
    %43 = arith.extui %42 : vector<16x256xi1> to vector<16x256xi32>
    %44 = arith.sitofp %43 : vector<16x256xi32> to vector<16x256xf32>
    %cst_10 = arith.constant dense<0.000000e+00> : vector<4x256xf32>
    %45 = tpu.matmul %3, %44, %cst_10 {dimension_numbers = #tpu.dot_dimension_numbers<[1], [0], [0], [1], [0, 0, 1, 1], [], []>} : vector<4x16xf32>, vector<16x256xf32>, vector<4x256xf32> -> vector<4x256xf32>
    %c0_11 = arith.constant 0 : index
    %c0_12 = arith.constant 0 : index
    %c0_13 = arith.constant 0 : index
    %46 = vector.load %arg6[%c0_11, %c0_12, %c0_13] : memref<1x4x256xf32, #tpu.memory_space<vmem>>, vector<1x4x256xf32>
    %47 = vector.shape_cast %46 : vector<1x4x256xf32> to vector<4x256xf32>
    %48 = vector.shape_cast %45 : vector<4x256xf32> to vector<1x4x256xf32>
    tpu.vector_store %arg6[%c0_11, %c0_12, %c0_13], %48 {strides = array<i32>} : memref<1x4x256xf32, #tpu.memory_space<vmem>>, vector<1x4x256xf32>,
    %c0_14 = arith.constant 0 : index
    %c0_15 = arith.constant 0 : index
    %c0_16 = arith.constant 0 : index
    %49 = vector.load %arg7[%c0_14, %c0_15, %c0_16] : memref<1x1x256xi32, #tpu.memory_space<vmem>>, vector<1x1x256xi32>
    %50 = vector.shape_cast %49 : vector<1x1x256xi32> to vector<1x256xi32>
    %51 = vector.shape_cast %40 : vector<1x256xi32> to vector<1x1x256xi32>
    tpu.vector_store %arg7[%c0_14, %c0_15, %c0_16], %51 {strides = array<i32>} : memref<1x1x256xi32, #tpu.memory_space<vmem>>, vector<1x1x256xi32>,
    %52 = arith.subf %45, %1 : vector<4x256xf32>
    %53 = arith.mulf %52, %52 : vector<4x256xf32>
    %54 = vector.shape_cast %53 : vector<4x256xf32> to vector<1x4x256xf32>
    %cst_17 = arith.constant dense<0.000000e+00> : vector<1xf32>
    %55 = vector.multi_reduction <add>, %54, %cst_17 [1, 2] : vector<1x4x256xf32> to vector<1xf32>
    %56 = vector.shape_cast %55 : vector<1xf32> to vector<1x1x1xf32>
    %57 = vector.extract %56[0, 0, 0] : f32 from vector<1x1x1xf32>
    %c0_i32 = arith.constant 0 : i32
    %58 = arith.cmpi eq, %arg1, %c0_i32 : i32
    %59 = arith.extui %58 : i1 to i32
    %c0_i32_18 = arith.constant 0 : i32
    %60 = arith.cmpi ne, %59, %c0_i32_18 : i32
    scf.if %60 {
      %cst_25 = arith.constant 0.000000e+00 : f32
      %68 = vector.broadcast %cst_25 : f32 to vector<1x1xf32>
      %c0_26 = arith.constant 0 : index
      %c0_27 = arith.constant 0 : index
      %c0_28 = arith.constant 0 : index
      %69 = vector.load %arg8[%c0_26, %c0_27, %c0_28] : memref<1x1x1xf32, #tpu.memory_space<vmem>>, vector<1x1x1xf32>
      %70 = vector.shape_cast %69 : vector<1x1x1xf32> to vector<1x1xf32>
      %71 = vector.shape_cast %68 : vector<1x1xf32> to vector<1x1x1xf32>
      tpu.vector_store %arg8[%c0_26, %c0_27, %c0_28], %71 {strides = array<i32>} : memref<1x1x1xf32, #tpu.memory_space<vmem>>, vector<1x1x1xf32>,
    } else {
    }
    %c0_19 = arith.constant 0 : index
    %c0_20 = arith.constant 0 : index
    %c0_21 = arith.constant 0 : index
    %61 = vector.load %arg8[%c0_19, %c0_20, %c0_21] : memref<1x1x1xf32, #tpu.memory_space<vmem>>, vector<1x1x1xf32>
    %62 = vector.shape_cast %61 : vector<1x1x1xf32> to vector<1x1xf32>
    %63 = vector.broadcast %57 : f32 to vector<1x1xf32>
    %64 = arith.addf %62, %63 : vector<1x1xf32>
    %c0_22 = arith.constant 0 : index
    %c0_23 = arith.constant 0 : index
    %c0_24 = arith.constant 0 : index
    %65 = vector.load %arg8[%c0_22, %c0_23, %c0_24] : memref<1x1x1xf32, #tpu.memory_space<vmem>>, vector<1x1x1xf32>
    %66 = vector.shape_cast %65 : vector<1x1x1xf32> to vector<1x1xf32>
    %67 = vector.shape_cast %64 : vector<1x1xf32> to vector<1x1x1xf32>
    tpu.vector_store %arg8[%c0_22, %c0_23, %c0_24], %67 {strides = array<i32>} : memref<1x1x1xf32, #tpu.memory_space<vmem>>, vector<1x1x1xf32>,
    return
  }
  func.func @transform_0(%arg0: i32, %arg1: i32) -> (i32, i32, i32) {
    %c0_i32 = arith.constant 0 : i32
    %c0_i32_0 = arith.constant 0 : i32
    return %arg0, %c0_i32, %arg1 : i32, i32, i32
  }
  func.func @transform_1(%arg0: i32, %arg1: i32) -> (i32, i32) {
    %c0_i32 = arith.constant 0 : i32
    %c0_i32_0 = arith.constant 0 : i32
    %c0_i32_1 = arith.constant 0 : i32
    return %c0_i32, %c0_i32_0 : i32, i32
  }
  func.func @transform_2(%arg0: i32, %arg1: i32) -> (i32, i32) {
    %c0_i32 = arith.constant 0 : i32
    %c0_i32_0 = arith.constant 0 : i32
    %c0_i32_1 = arith.constant 0 : i32
    return %c0_i32, %c0_i32_0 : i32, i32
  }
  func.func @transform_3(%arg0: i32, %arg1: i32) -> (i32, i32) {
    %c0_i32 = arith.constant 0 : i32
    %c0_i32_0 = arith.constant 0 : i32
    %c0_i32_1 = arith.constant 0 : i32
    return %c0_i32, %c0_i32_0 : i32, i32
  }
  func.func @transform_4(%arg0: i32, %arg1: i32) -> (i32, i32, i32) {
    %c0_i32 = arith.constant 0 : i32
    %c0_i32_0 = arith.constant 0 : i32
    return %arg0, %c0_i32, %arg1 : i32, i32, i32
  }
  func.func @transform_5(%arg0: i32, %arg1: i32) -> (i32, i32, i32) {
    %c0_i32 = arith.constant 0 : i32
    %c0_i32_0 = arith.constant 0 : i32
    return %arg0, %c0_i32, %arg1 : i32, i32, i32
  }
  func.func @transform_6(%arg0: i32, %arg1: i32) -> (i32, i32, i32) {
    %c0_i32 = arith.constant 0 : i32
    %c0_i32_0 = arith.constant 0 : i32
    %c0_i32_1 = arith.constant 0 : i32
    return %arg0, %c0_i32, %c0_i32_0 : i32, i32, i32
  }
}

</mosaic_0001>

<llo_original>
// kernel: tpu_custom_call.1
$region0: #{tpu_custom_call.1}
  #allocation0 [shape = 'u32[]', space=smem, size = 0x4, offset = 0x4, fixed_abs, tag = 'smem constant byte address 0x4 - core index']
  #allocation1 [shape = 'u32[72,128]{1,0:T(1,128)}', space=vmem, size = 0x9000, scoped, tag = 'internal scratch']
  %s0 = inlined_call_operand.vmem [shape: f32[2,4,256], index: 0, kind: input, shape index: {}]
  %s1 = inlined_call_operand.vmem [shape: f32[16,4], index: 1, kind: input, shape index: {}]
  %s2 = inlined_call_operand.vmem [shape: f32[4,16], index: 2, kind: input, shape index: {}]
  %s3 = inlined_call_operand.vmem [shape: f32[16,1], index: 3, kind: input, shape index: {}]
  %s4 = inlined_call_operand.hbm [shape: f32[2,4,256], index: 4, kind: output, shape index: {0}]
  %s5 = inlined_call_operand.hbm [shape: s32[2,1,256], index: 5, kind: output, shape index: {1}]
  %s6 = inlined_call_operand.vmem [shape: f32[2,1,1], index: 6, kind: output, shape index: {2}]
  %7 = xla_tuple %s4, %s5, %s6
  %s8 = sld [smem:[#allocation0]]
  $region69: #{tpu_custom_call.1} parent=0
    _
  %s10 = ssub.s32 1, %s8
  %s11 = scalar_select 0, %s10, %s8
  $region1: #{tpu_custom_call.1} parent=0
    #allocation2 [shape = 'u8[8192]{0}', space=vmem, size = 0x2000, scoped, tag = 'output window, operand 0']
    #allocation3 [shape = 's32[2]{0}', space=sflag, size = 0x8, scoped, tag = 'scoped memory for tpu_custom_call.1']
    #allocation4 [shape = 'u8[2048]{0}', space=vmem, size = 0x800, scoped, tag = 'output window, operand 1']
    #allocation5 [shape = 's32[2]{0}', space=sflag, size = 0x8, scoped, tag = 'scoped memory for tpu_custom_call.1']
    %12 = vsyncpa [#allocation3], 0
    %s13 = scalar_lea.sflag [#allocation3], 1
    %14 = vsyncpa %s13, 0
    %15 = vsyncpa [#allocation5], 0
    %s16 = scalar_lea.sflag [#allocation5], 1
    %17 = vsyncpa %s16, 0
    loop: start=0, step=1, limit=4
    $region2: #{tpu_custom_call.1} parent=1 // loop_pre_header
      _
    $region3: #{tpu_custom_call.1} parent=1 // loop_header
      %s19 = sphi 0, %s23
      %p20 = scmp.ge.s32.totalorder %s19, 4
      %s26 = sphi 0, %s38
      %s27 = sphi 0, %s34
      %s28 = sphi 0, %s26
      %s29 = sphi 0, %s27
      %s30 = sphi 0, %s28
      %s31 = sphi 0, %s29
      %s43 = sphi 0, %s45
      %s46 = sphi 0, %s43
      %s47 = sphi 0, %s46
      %s63 = sphi 0, %s47
      %s67 = sphi 0, %s67
      %s69 = sphi 0, %s67
      %s70 = sphi 0, %s69
      %s84 = sphi 0, %s70
      %s88 = sphi 0, %s88
      %s90 = sphi 0, %s88
      %s91 = sphi 0, %s90
      %s105 = sphi 0, %s91
      %s109 = sphi 0, %s109
      %s111 = sphi 0, %s109
      %s112 = sphi 0, %s111
      %s126 = sphi 0, %s112
      %s134 = sphi 0, %s136
      %s137 = sphi 0, %s134
      %s138 = sphi 0, %s137
      %s154 = sphi 0, %s138
      %s162 = sphi 0, %s164
      %s165 = sphi 0, %s162
      %s166 = sphi 0, %s165
      %s182 = sphi 0, %s166
      %s188 = sphi 0, %s190
      %s191 = sphi 0, %s188
      %s192 = sphi 0, %s191
      %s208 = sphi 0, %s192
    $region4: #{tpu_custom_call.1} parent=1 // loop_header_branch
      %22 = sbr.rel (%p20) target = $region8
    $region5: #{tpu_custom_call.1} parent=1 // loop_body
      %s24 = ssub.s32 %s19, 1
      %s25 = ssub.s32 %s19, 2
      %s32 = sadd.s32 1, %s27
      %p33 = scmp.ge.s32.totalorder %s32, 1
      %s34 = scalar_select %p33, 0, %s32
      %s35 = sadd.s32 1, %s26
      %s36 = scalar_select %p33, %s35, %s26
      %p37 = scmp.ge.s32.totalorder %s36, 2
      %s38 = scalar_select %p37, 0, %s36
      %s39 = ssub.s32 %s26, %s38
      %s40 = ssub.s32 %s27, %s34
      %s41 = sor.u32 %s39, %s40
      %p42 = scmp.eq.s32.totalorder %s41, 0
      %s44 = sadd.s32 %s43, 1
      %s45 = scalar_select %p42, %s43, %s44
      %p48 = pneg %p42
      %p49 = scmp.eq.s32.totalorder %s19, 1
      %p50 = por %p48, %p49
      %p51 = scmp.ne.s32.totalorder %s43, %s46
      %p52 = scmp.eq.s32.totalorder %s19, 0
      %p53 = por %p51, %p52
      %p54 = scmp.ne.s32.totalorder %s43, %s46
      %p55 = scmp.eq.s32.totalorder %s24, 1
      %p56 = por %p54, %p55
      %p57 = scmp.ne.s32.totalorder %s46, %s47
      %p58 = scmp.eq.s32.totalorder %s24, 0
      %p59 = por %p57, %p58
      %p60 = scmp.ne.s32.totalorder %s46, %s47
      %p61 = scmp.eq.s32.totalorder %s25, 1
      %p62 = por %p60, %p61
      %p64 = scmp.ne.s32.totalorder %s47, %s63
      %p65 = scmp.eq.s32.totalorder %s25, 0
      %p66 = por %p64, %p65
      %s68 = sadd.s32 %s67, 1
      %p71 = scmp.eq.s32.totalorder %s19, 1
      %p72 = scmp.ne.s32.totalorder %s67, %s69
      %p73 = scmp.eq.s32.totalorder %s19, 0
      %p74 = por %p72, %p73
      %p75 = scmp.ne.s32.totalorder %s67, %s69
      %p76 = scmp.eq.s32.totalorder %s24, 1
      %p77 = por %p75, %p76
      %p78 = scmp.ne.s32.totalorder %s69, %s70
      %p79 = scmp.eq.s32.totalorder %s24, 0
      %p80 = por %p78, %p79
      %p81 = scmp.ne.s32.totalorder %s69, %s70
      %p82 = scmp.eq.s32.totalorder %s25, 1
      %p83 = por %p81, %p82
      %p85 = scmp.ne.s32.totalorder %s70, %s84
      %p86 = scmp.eq.s32.totalorder %s25, 0
      %p87 = por %p85, %p86
      %s89 = sadd.s32 %s88, 1
      %p92 = scmp.eq.s32.totalorder %s19, 1
      %p93 = scmp.ne.s32.totalorder %s88, %s90
      %p94 = scmp.eq.s32.totalorder %s19, 0
      %p95 = por %p93, %p94
      %p96 = scmp.ne.s32.totalorder %s88, %s90
      %p97 = scmp.eq.s32.totalorder %s24, 1
      %p98 = por %p96, %p97
      %p99 = scmp.ne.s32.totalorder %s90, %s91
      %p100 = scmp.eq.s32.totalorder %s24, 0
      %p101 = por %p99, %p100
      %p102 = scmp.ne.s32.totalorder %s90, %s91
      %p103 = scmp.eq.s32.totalorder %s25, 1
      %p104 = por %p102, %p103
      %p106 = scmp.ne.s32.totalorder %s91, %s105
      %p107 = scmp.eq.s32.totalorder %s25, 0
      %p108 = por %p106, %p107
      %s110 = sadd.s32 %s109, 1
      %p113 = scmp.eq.s32.totalorder %s19, 1
      %p114 = scmp.ne.s32.totalorder %s109, %s111
      %p115 = scmp.eq.s32.totalorder %s19, 0
      %p116 = por %p114, %p115
      %p117 = scmp.ne.s32.totalorder %s109, %s111
      %p118 = scmp.eq.s32.totalorder %s24, 1
      %p119 = por %p117, %p118
      %p120 = scmp.ne.s32.totalorder %s111, %s112
      %p121 = scmp.eq.s32.totalorder %s24, 0
      %p122 = por %p120, %p121
      %p123 = scmp.ne.s32.totalorder %s111, %s112
      %p124 = scmp.eq.s32.totalorder %s25, 1
      %p125 = por %p123, %p124
      %p127 = scmp.ne.s32.totalorder %s112, %s126
      %p128 = scmp.eq.s32.totalorder %s25, 0
      %p129 = por %p127, %p128
      %s130 = ssub.s32 %s26, %s38
      %s131 = ssub.s32 %s27, %s34
      %s132 = sor.u32 %s130, %s131
      %p133 = scmp.eq.s32.totalorder %s132, 0
      %s135 = sadd.s32 %s134, 1
      %s136 = scalar_select %p133, %s134, %s135
      %p139 = pneg %p133
      %p140 = scmp.eq.s32.totalorder %s19, 1
      %p141 = por %p139, %p140
      %p142 = scmp.ne.s32.totalorder %s134, %s137
      %p143 = scmp.eq.s32.totalorder %s19, 0
      %p144 = por %p142, %p143
      %p145 = scmp.ne.s32.totalorder %s134, %s137
      %p146 = scmp.eq.s32.totalorder %s24, 1
      %p147 = por %p145, %p146
      %p148 = scmp.ne.s32.totalorder %s137, %s138
      %p149 = scmp.eq.s32.totalorder %s24, 0
      %p150 = por %p148, %p149
      %p151 = scmp.ne.s32.totalorder %s137, %s138
      %p152 = scmp.eq.s32.totalorder %s25, 1
      %p153 = por %p151, %p152
      %p155 = scmp.ne.s32.totalorder %s138, %s154
      %p156 = scmp.eq.s32.totalorder %s25, 0
      %p157 = por %p155, %p156
      %s158 = ssub.s32 %s26, %s38
      %s159 = ssub.s32 %s27, %s34
      %s160 = sor.u32 %s158, %s159
      %p161 = scmp.eq.s32.totalorder %s160, 0
      %s163 = sadd.s32 %s162, 1
      %s164 = scalar_select %p161, %s162, %s163
      %p167 = pneg %p161
      %p168 = scmp.eq.s32.totalorder %s19, 1
      %p169 = por %p167, %p168
      %p170 = scmp.ne.s32.totalorder %s162, %s165
      %p171 = scmp.eq.s32.totalorder %s19, 0
      %p172 = por %p170, %p171
      %p173 = scmp.ne.s32.totalorder %s162, %s165
      %p174 = scmp.eq.s32.totalorder %s24, 1
      %p175 = por %p173, %p174
      %p176 = scmp.ne.s32.totalorder %s165, %s166
      %p177 = scmp.eq.s32.totalorder %s24, 0
      %p178 = por %p176, %p177
      %p179 = scmp.ne.s32.totalorder %s165, %s166
      %p180 = scmp.eq.s32.totalorder %s25, 1
      %p181 = por %p179, %p180
      %p183 = scmp.ne.s32.totalorder %s166, %s182
      %p184 = scmp.eq.s32.totalorder %s25, 0
      %p185 = por %p183, %p184
      %s186 = ssub.s32 %s26, %s38
      %p187 = scmp.eq.s32.totalorder %s186, 0
      %s189 = sadd.s32 %s188, 1
      %s190 = scalar_select %p187, %s188, %s189
      %p193 = pneg %p187
      %p194 = scmp.eq.s32.totalorder %s19, 1
      %p195 = por %p193, %p194
      %p196 = scmp.ne.s32.totalorder %s188, %s191
      %p197 = scmp.eq.s32.totalorder %s19, 0
      %p198 = por %p196, %p197
      %p199 = scmp.ne.s32.totalorder %s188, %s191
      %p200 = scmp.eq.s32.totalorder %s24, 1
      %p201 = por %p199, %p200
      %p202 = scmp.ne.s32.totalorder %s191, %s192
      %p203 = scmp.eq.s32.totalorder %s24, 0
      %p204 = por %p202, %p203
      %p205 = scmp.ne.s32.totalorder %s191, %s192
      %p206 = scmp.eq.s32.totalorder %s25, 1
      %p207 = por %p205, %p206
      %p209 = scmp.ne.s32.totalorder %s192, %s208
      %p210 = scmp.eq.s32.totalorder %s25, 0
      %p211 = por %p209, %p210
      %p212 = scmp.le.s32.totalorder 1, %s19
      %p213 = scmp.lt.s32.totalorder %s19, 3
      %p214 = pnand %p212, %p213
      %p215 = pneg %p214
      // Predicated region
      $region9: #{tpu_custom_call.1} parent=5 // pred_check
        _
      $region10: #{tpu_custom_call.1} parent=5 // pred_check_branch
        %217 = sbr.rel (%p214) target = $region12
      $region11: #{tpu_custom_call.1} parent=5 // pred_region
        %s218 = ssub.s32 %s19, 1
        // Predicated region
        $region13: #{tpu_custom_call.1} parent=11 // pred_check
          %p219 = pneg %p80
        $region14: #{tpu_custom_call.1} parent=11 // pred_check_branch
          %221 = sbr.rel (%p219) target = $region16
        $region15: #{tpu_custom_call.1} parent=11 // pred_region
          _
        $region16: #{tpu_custom_call.1} parent=11 // pred_fallthru
          _
        // Predicated region
        $region17: #{tpu_custom_call.1} parent=11 // pred_check
          %p222 = pneg %p101
        $region18: #{tpu_custom_call.1} parent=11 // pred_check_branch
          %224 = sbr.rel (%p222) target = $region20
        $region19: #{tpu_custom_call.1} parent=11 // pred_region
          _
        $region20: #{tpu_custom_call.1} parent=11 // pred_fallthru
          _
        // Predicated region
        $region21: #{tpu_custom_call.1} parent=11 // pred_check
          %p225 = pneg %p122
        $region22: #{tpu_custom_call.1} parent=11 // pred_check_branch
          %227 = sbr.rel (%p225) target = $region24
        $region23: #{tpu_custom_call.1} parent=11 // pred_region
          _
        $region24: #{tpu_custom_call.1} parent=11 // pred_fallthru
          _
      $region12: #{tpu_custom_call.1} parent=5 // pred_fallthru
        _
      %p228 = scmp.lt.s32.totalorder %s19, 2
      // Predicated region
      $region25: #{tpu_custom_call.1} parent=5 // pred_check
        %p229 = pneg %p228
      $region26: #{tpu_custom_call.1} parent=5 // pred_check_branch
        %231 = sbr.rel (%p229) target = $region28
      $region27: #{tpu_custom_call.1} parent=5 // pred_region
        // Predicated region
        $region29: #{tpu_custom_call.1} parent=27 // pred_check
          %p232 = pneg %p53
        $region30: #{tpu_custom_call.1} parent=27 // pred_check_branch
          %234 = sbr.rel (%p232) target = $region32
        $region31: #{tpu_custom_call.1} parent=27 // pred_region
          %s235 = smul.u32 2, %s27
          %p236 = scmp.lt.s32.totalorder %s26, 1
          %s237 = scalar_select %p236, %s26, 1
          %p238 = scmp.lt.s32.totalorder %s235, 1
          %s239 = scalar_select %p238, %s235, 1
          %s240 = smul.addr %s237, 2
          %s241 = sadd.s32 %s239, %s240
          %s242 = smul.addr %s241, 4
          %s243 = scalar_lea.vmem %s0, %s242
          %s244 = smul.u32 2, %s27
        $region32: #{tpu_custom_call.1} parent=27 // pred_fallthru
          _
      $region28: #{tpu_custom_call.1} parent=5 // pred_fallthru
        _
      %p245 = scmp.le.s32.totalorder 1, %s19
      %p246 = scmp.lt.s32.totalorder %s19, 3
      %p247 = pnand %p245, %p246
      %p248 = pneg %p247
      // Predicated region
      $region33: #{tpu_custom_call.1} parent=5 // pred_check
        _
      $region34: #{tpu_custom_call.1} parent=5 // pred_check_branch
        %250 = sbr.rel (%p247) target = $region36
      $region35: #{tpu_custom_call.1} parent=5 // pred_region
        %s251 = ssub.s32 %s19, 1
        %s252 = smul.u32 2, %s29
        %p253 = scmp.lt.s32.totalorder %s28, 1
        %s254 = scalar_select %p253, %s28, 1
        %p255 = scmp.lt.s32.totalorder %s252, 1
        %s256 = scalar_select %p255, %s252, 1
        %s257 = smul.addr %s254, 2
        %s258 = sadd.s32 %s256, %s257
        %s259 = smul.addr %s258, 4
        %s260 = scalar_lea.vmem %s0, %s259
        %p261 = pneg %p59
        %p262 = pneg %p56
        %p263 = pneg %p80
        %p264 = pneg %p77
        %p265 = pneg %p101
        %p266 = pneg %p98
        %p267 = pneg %p122
        %p268 = pneg %p119
        %p269 = pneg %p150
        %p270 = pneg %p147
        %s271 = sand.u32 %s137, 1
        %s272 = scalar_lea.sflag [#allocation3], %s271
        %s273 = sand.u32 %s137, 1
        %s274 = smul.addr %s273, 8
        %s275 = scalar_lea.vmem [#allocation2], %s274
        %p276 = pneg %p178
        %p277 = pneg %p175
        %s278 = sand.u32 %s165, 1
        %s279 = scalar_lea.sflag [#allocation5], %s278
        %s280 = sand.u32 %s165, 1
        %s281 = smul.addr %s280, 2
        %s282 = scalar_lea.vmem [#allocation4], %s281
        %p283 = pneg %p204
        %p284 = pneg %p201
        %p285 = scmp.lt.s32.totalorder %s28, 1
        %s286 = scalar_select %p285, %s28, 1
        %s287 = scalar_lea.vmem %s6, %s286
        %s288 = smul.u32 2, %s29
        %p289 = scmp.lt.s32.totalorder %s28, 1
        %s290 = scalar_select %p289, %s28, 1
        %p291 = scmp.lt.s32.totalorder %s288, 1
        %s292 = scalar_select %p291, %s288, 1
        %s293 = smul.addr %s290, 2
        %s294 = sadd.s32 %s292, %s293
        %s295 = smul.addr %s294, 4
        %s296 = scalar_lea.vmem %s0, %s295
        %s297 = smul.u32 2, %s29
        %s298 = smul.u32 2, %s29
        %s299 = smul.u32 2, %s29
        %p300 = scmp.lt.s32.totalorder %s28, 1
        %s301 = scalar_select %p300, %s28, 1
        %s302 = scalar_lea.vmem %s6, %s301
        %v303 = vld [vmem:[%s296] sm:$0xff]
        %v304 = vld [vmem:[%s1] sm:$0xff]
        %v305 = vld [vmem:[%s1 + $0x8] sm:$0xff]
        %v306 = vld [vmem:[%s2] sm:$0xf]
        %v307 = vld [vmem:[%s3] sm:$0xff]
        %v308 = vld [vmem:[%s3 + $0x8] sm:$0xff]
        %310 = vset.pattern.permute.xlu0 0
        %311 = vperm.xlu0 %310, %v304
        %v312 = vpop.permute.xlu0 %311
        %315 = vset.pattern.permute.xlu0 0
        %316 = vperm.xlu0 %315, %v305
        %v317 = vpop.permute.xlu0 %316
        %v320 = vperm.slane %v303, 0
        %v321 = vperm.slane %v303, 4
        %v324 = vperm.slane %v320, 0
        %v325 = vperm.slane %v321, 0
        %v326 = vmul.f32 %v312, %v324
        %v327 = vmul.f32 %v312, %v325
        %v328 = vmul.f32 %v317, %v324
        %v329 = vmul.f32 %v317, %v325
        %330 = vset.pattern.permute.xlu0 1
        %331 = vperm.xlu0 %330, %v304
        %v332 = vpop.permute.xlu0 %331
        %334 = vset.pattern.permute.xlu0 1
        %335 = vperm.xlu0 %334, %v305
        %v336 = vpop.permute.xlu0 %335
        %v338 = vperm.slane %v303, 1
        %v339 = vperm.slane %v303, 5
        %v342 = vperm.slane %v338, 1
        %v343 = vperm.slane %v339, 1
        %v344 = vmul.f32 %v332, %v342
        %v345 = vmul.f32 %v332, %v343
        %v346 = vmul.f32 %v336, %v342
        %v347 = vmul.f32 %v336, %v343
        %v348 = vadd.f32 %v326, %v344
        %v349 = vadd.f32 %v327, %v345
        %v350 = vadd.f32 %v328, %v346
        %v351 = vadd.f32 %v329, %v347
        %352 = vset.pattern.permute.xlu0 2
        %353 = vperm.xlu0 %352, %v304
        %v354 = vpop.permute.xlu0 %353
        %356 = vset.pattern.permute.xlu0 2
        %357 = vperm.xlu0 %356, %v305
        %v358 = vpop.permute.xlu0 %357
        %v360 = vperm.slane %v303, 2
        %v361 = vperm.slane %v303, 6
        %v364 = vperm.slane %v360, 2
        %v365 = vperm.slane %v361, 2
        %v366 = vmul.f32 %v354, %v364
        %v367 = vmul.f32 %v354, %v365
        %v368 = vmul.f32 %v358, %v364
        %v369 = vmul.f32 %v358, %v365
        %v370 = vadd.f32 %v348, %v366
        %v371 = vadd.f32 %v349, %v367
        %v372 = vadd.f32 %v350, %v368
        %v373 = vadd.f32 %v351, %v369
        %374 = vset.pattern.permute.xlu0 3
        %375 = vperm.xlu0 %374, %v304
        %v376 = vpop.permute.xlu0 %375
        %378 = vset.pattern.permute.xlu0 3
        %379 = vperm.xlu0 %378, %v305
        %v380 = vpop.permute.xlu0 %379
        %v382 = vperm.slane %v303, 3
        %v383 = vperm.slane %v303, 7
        %v386 = vperm.slane %v382, 3
        %v387 = vperm.slane %v383, 3
        %v388 = vmul.f32 %v376, %v386
        %v389 = vmul.f32 %v376, %v387
        %v390 = vmul.f32 %v380, %v386
        %v391 = vmul.f32 %v380, %v387
        %v392 = vadd.f32 %v370, %v388
        %v393 = vadd.f32 %v371, %v389
        %v394 = vadd.f32 %v372, %v390
        %v395 = vadd.f32 %v373, %v391
        %v396 = vmul.f32 %v392, 2.0
        %v397 = vmul.f32 %v393, 2.0
        %v398 = vmul.f32 %v394, 2.0
        %v399 = vmul.f32 %v395, 2.0
        %401 = vset.pattern.permute.xlu0 0
        %402 = vperm.xlu0 %401, %v307
        %v403 = vpop.permute.xlu0 %402
        %406 = vset.pattern.permute.xlu0 0
        %407 = vperm.xlu0 %406, %v308
        %v408 = vpop.permute.xlu0 %407
        %v410 = vsub.f32 %v403, %v396
        %v411 = vsub.f32 %v403, %v397
        %v412 = vsub.f32 %v408, %v398
        %v413 = vsub.f32 %v408, %v399
        %v414 = vmin.f32 %v410, %v412
        %v415 = vrot.slane %v414, 4
        %v416 = vmin.f32 %v414, %v415
        %v417 = vrot.slane %v416, 2
        %v418 = vmin.f32 %v416, %v417
        %v419 = vrot.slane %v418, 1
        %v420 = vmin.f32 %v418, %v419
        %v421 = vmin.f32 %v411, %v413
        %v422 = vrot.slane %v421, 4
        %v423 = vmin.f32 %v421, %v422
        %v424 = vrot.slane %v423, 2
        %v425 = vmin.f32 %v423, %v424
        %v426 = vrot.slane %v425, 1
        %v427 = vmin.f32 %v425, %v426
        %v428 = vlaneseq
        %v429 = vshrl.u32 %v428, 7
        %v430 = vadd.s32 %v429, 8
        %vm431 = vcmp.eq.f32.partialorder %v410, %v420
        %vm432 = vcmp.eq.f32.partialorder %v411, %v427
        %vm433 = vcmp.eq.f32.partialorder %v412, %v420
        %vm434 = vcmp.eq.f32.partialorder %v413, %v427
        %v435 = vsel %vm431, %v429, 16
        %v436 = vsel %vm432, %v429, 16
        %v437 = vsel %vm433, %v430, 16
        %v438 = vsel %vm434, %v430, 16
        %vm439 = vcmp.lt.s32.totalorder %v435, %v437
        %v440 = vsel %vm439, %v435, %v437
        %v441 = vrot.slane %v440, 4
        %vm442 = vcmp.lt.s32.totalorder %v440, %v441
        %v443 = vsel %vm442, %v440, %v441
        %v444 = vrot.slane %v443, 2
        %vm445 = vcmp.lt.s32.totalorder %v443, %v444
        %v446 = vsel %vm445, %v443, %v444
        %v447 = vrot.slane %v446, 1
        %vm448 = vcmp.lt.s32.totalorder %v446, %v447
        %v449 = vsel %vm448, %v446, %v447
        %vm450 = vcmp.lt.s32.totalorder %v436, %v438
        %v451 = vsel %vm450, %v436, %v438
        %v452 = vrot.slane %v451, 4
        %vm453 = vcmp.lt.s32.totalorder %v451, %v452
        %v454 = vsel %vm453, %v451, %v452
        %v455 = vrot.slane %v454, 2
        %vm456 = vcmp.lt.s32.totalorder %v454, %v455
        %v457 = vsel %vm456, %v454, %v455
        %v458 = vrot.slane %v457, 1
        %vm459 = vcmp.lt.s32.totalorder %v457, %v458
        %v460 = vsel %vm459, %v457, %v458
        %vm461 = vcmp.eq.s32.totalorder %v429, %v449
        %vm462 = vcmp.eq.s32.totalorder %v429, %v460
        %vm463 = vcmp.eq.s32.totalorder %v430, %v449
        %vm464 = vcmp.eq.s32.totalorder %v430, %v460
        %v465 = vsel %vm461, 1, 0
        %v466 = vsel %vm462, 1, 0
        %v467 = vsel %vm463, 1, 0
        %v468 = vsel %vm464, 1, 0
        %v469 = vcvt.s32.f32 %v465
        %v470 = vcvt.s32.f32 %v466
        %v471 = vcvt.s32.f32 %v467
        %v472 = vcvt.s32.f32 %v468
        %vm473 = vcmask 130048
        %v475 = vsel %vm473, %v306, 0
        %477 = vmatpush.msra.mxu0 0.0
        %478 = vmatpush.msra.mxu0 0.0
        %479 = vmatpush.msra.mxu0 0.0
        %480 = vmatpush.msra.mxu0 0.0
        %481 = vmatpush.msra.mxu0 0.0
        %482 = vmatpush.msra.mxu0 0.0
        %483 = vmatpush.msra.mxu0 0.0
        %484 = vmatpush.msra.mxu0 0.0
        %485 = vmatpush.msra.mxu0 0.0
        %486 = vmatpush.msra.mxu0 0.0
        %487 = vmatpush.msra.mxu0 0.0
        %488 = vmatpush.msra.mxu0 0.0
        %489 = vmatpush.msra.mxu0 0.0
        %490 = vmatpush.msra.mxu0 0.0
        %491 = vmatpush.msra.mxu0 %v471
        %492 = vmatpush.msra.mxu0 %v469
        %493 = vmatmul.f32.gmra.mxu0 %v475
        %v494 = vpop.f32.mrf.mxu0
        %v495 = vadd.f32 0.0, %v494
        %496 = vdwg.mxu0
        %497 = vmatpush.msra.mxu0 0.0
        %498 = vmatpush.msra.mxu0 0.0
        %499 = vmatpush.msra.mxu0 0.0
        %500 = vmatpush.msra.mxu0 0.0
        %501 = vmatpush.msra.mxu0 0.0
        %502 = vmatpush.msra.mxu0 0.0
        %503 = vmatpush.msra.mxu0 0.0
        %504 = vmatpush.msra.mxu0 0.0
        %505 = vmatpush.msra.mxu0 0.0
        %506 = vmatpush.msra.mxu0 0.0
        %507 = vmatpush.msra.mxu0 0.0
        %508 = vmatpush.msra.mxu0 0.0
        %509 = vmatpush.msra.mxu0 0.0
        %510 = vmatpush.msra.mxu0 0.0
        %511 = vmatpush.msra.mxu0 %v472
        %512 = vmatpush.msra.mxu0 %v470
        %513 = vmatmul.f32.gmra.mxu0 %v475
        %v514 = vpop.f32.mrf.mxu0
        %v515 = vadd.f32 0.0, %v514
        %516 = vdwg.mxu0
        %v519 = vrot.slane %v515, 4
        %vm520 = vcmask 1043456
        %v521 = vsel %vm520, %v495, %v519
        %523 = vst [vmem:[%s275] sm:$0xff] %v521
        %v524 = vrot.slane %v460, 7
        %vm525 = vcmask 1040384
        %v526 = vsel %vm525, %v449, %v524
        %v527 = vlaneseq
        %vm528 = vcmp.ge.s32.totalorder %v527, 0
        %vm529 = vcmp.lt.s32.totalorder %v527, 256
        %vm530 = vmand %vm528, %vm529
        %531 = vst.msk [vmem:[%s282] sm:$0x3] %vm530, %v526
        %532 = vst [vmem:[#allocation1] ss:$2 sm:$0xff] %v303
        %v533 = vld.sshfl [vmem:[#allocation1] sm:$0xff pattern:$0x75316420]
        %v534 = vld.sshfl [vmem:[#allocation1 + $0x8] sm:$0xff pattern:$0x75316420]
        %v537 = vsub.f32 %v495, %v533
        %v538 = vsub.f32 %v515, %v534
        %v539 = vmul.f32 %v537, %v537
        %v540 = vmul.f32 %v538, %v538
        %v541 = vsel %vm520, %v539, 0.0
        %v542 = vsel %vm520, %v540, 0.0
        %v543 = vadd.f32 %v541, %v542
        %544 = vadd.xlane.f32.xlu0 %v543
        %v545 = vpop.xlane.xlu0 %544
        %v546 = vrot.slane %v545, 4
        %v547 = vadd.f32 %v545, %v546
        %v548 = vrot.slane %v547, 2
        %v549 = vadd.f32 %v547, %v548
        %v550 = vrot.slane %v549, 1
        %v551 = vadd.f32 %v549, %v550
        %s552 = vtos %v551
        %p553 = scmp.eq.s32.totalorder %s29, 0
        // Predicated region
        $region37: #{tpu_custom_call.1} parent=35 // pred_check
          %p554 = pneg %p553
        $region38: #{tpu_custom_call.1} parent=35 // pred_check_branch
          %556 = sbr.rel (%p554) target = $region40
        $region39: #{tpu_custom_call.1} parent=35 // pred_region
          %vm557 = vcmask 0
          %558 = vst.msk [vmem:[%s302] sm:$0x1] %vm557, 0.0
        $region40: #{tpu_custom_call.1} parent=35 // pred_fallthru
          _
        %v559 = vld [vmem:[%s302] sm:$0x1]
        %v560 = vstv %s552
        %v561 = vadd.f32 %v559, %v560
        %vm562 = vcmask 0
        %563 = vst.msk [vmem:[%s302] sm:$0x1] %vm562, %v561
        %s564 = sand.u32 %s137, 1
        %s565 = scalar_lea.sflag [#allocation3], %s564
        %s566 = sand.u32 %s137, 1
        %s567 = smul.addr %s566, 8
        %s568 = scalar_lea.vmem [#allocation2], %s567
        %s569 = sand.u32 %s165, 1
        %s570 = scalar_lea.sflag [#allocation5], %s569
        %s571 = sand.u32 %s165, 1
        %s572 = smul.addr %s571, 2
        %s573 = scalar_lea.vmem [#allocation4], %s572
        %p574 = scmp.lt.s32.totalorder %s28, 1
        %s575 = scalar_select %p574, %s28, 1
        %s576 = scalar_lea.vmem %s6, %s575
        // Predicated region
        $region41: #{tpu_custom_call.1} parent=35 // pred_check
          %p577 = pneg %p147
        $region42: #{tpu_custom_call.1} parent=35 // pred_check_branch
          %579 = sbr.rel (%p577) target = $region44
        $region43: #{tpu_custom_call.1} parent=35 // pred_region
          %s580 = smul.u32 2, %s29
          %582 = vsyncadd %s565, 0
          %s583 = smul.addr %s28, 2
          %s584 = sadd.s32 %s580, %s583
          %s585 = smul.addr %s584, 4
          %s586 = scalar_lea.hbm %s4, %s585
          %s588 = sshll.u32 %s568, 4
          %s589 = int_to_ptr.vmem [resolvable:$true] %s588
          %s590 = sshll.u32 %s586, 4
          %s591 = int_to_ptr.hbm [resolvable:$true] %s590
          %593 = dma.vmem_to_hbm [thread:$0]  %s589, 128, %s591, %s565
        $region44: #{tpu_custom_call.1} parent=35 // pred_fallthru
          _
        // Predicated region
        $region45: #{tpu_custom_call.1} parent=35 // pred_check
          %p594 = pneg %p175
        $region46: #{tpu_custom_call.1} parent=35 // pred_check_branch
          %596 = sbr.rel (%p594) target = $region48
        $region47: #{tpu_custom_call.1} parent=35 // pred_region
          %s597 = smul.u32 2, %s29
          %599 = vsyncadd %s570, 0
          %s600 = smul.addr %s28, 2
          %s601 = sadd.s32 %s597, %s600
          %s602 = scalar_lea.hbm %s5, %s601
          %s604 = sshll.u32 %s573, 4
          %s605 = int_to_ptr.vmem [resolvable:$true] %s604
          %s606 = sshll.u32 %s602, 4
          %s607 = int_to_ptr.hbm [resolvable:$true] %s606
          %609 = dma.vmem_to_hbm [thread:$0]  %s605, 32, %s607, %s570
        $region48: #{tpu_custom_call.1} parent=35 // pred_fallthru
          _
        // Predicated region
        $region49: #{tpu_custom_call.1} parent=35 // pred_check
          %p610 = pneg %p201
        $region50: #{tpu_custom_call.1} parent=35 // pred_check_branch
          %612 = sbr.rel (%p610) target = $region52
        $region51: #{tpu_custom_call.1} parent=35 // pred_region
          _
        $region52: #{tpu_custom_call.1} parent=35 // pred_fallthru
          _
      $region36: #{tpu_custom_call.1} parent=5 // pred_fallthru
        _
      %p613 = scmp.le.s32.totalorder 2, %s19
      // Predicated region
      $region53: #{tpu_custom_call.1} parent=5 // pred_check
        %p614 = pneg %p613
      $region54: #{tpu_custom_call.1} parent=5 // pred_check_branch
        %616 = sbr.rel (%p614) target = $region56
      $region55: #{tpu_custom_call.1} parent=5 // pred_region
        %s617 = ssub.s32 %s19, 2
        // Predicated region
        $region57: #{tpu_custom_call.1} parent=55 // pred_check
          %p618 = pneg %p153
        $region58: #{tpu_custom_call.1} parent=55 // pred_check_branch
          %620 = sbr.rel (%p618) target = $region60
        $region59: #{tpu_custom_call.1} parent=55 // pred_region
          %s621 = sand.u32 %s138, 1
          %s622 = scalar_lea.sflag [#allocation3], %s621
          %s623 = sand.u32 %s138, 1
          %s624 = smul.addr %s623, 8
          %s625 = scalar_lea.vmem [#allocation2], %s624
          %627 = dma.done %s622, 128
        $region60: #{tpu_custom_call.1} parent=55 // pred_fallthru
          _
        // Predicated region
        $region61: #{tpu_custom_call.1} parent=55 // pred_check
          %p628 = pneg %p181
        $region62: #{tpu_custom_call.1} parent=55 // pred_check_branch
          %630 = sbr.rel (%p628) target = $region64
        $region63: #{tpu_custom_call.1} parent=55 // pred_region
          %s631 = sand.u32 %s166, 1
          %s632 = scalar_lea.sflag [#allocation5], %s631
          %s633 = sand.u32 %s166, 1
          %s634 = smul.addr %s633, 2
          %s635 = scalar_lea.vmem [#allocation4], %s634
          %637 = dma.done %s632, 32
        $region64: #{tpu_custom_call.1} parent=55 // pred_fallthru
          _
        // Predicated region
        $region65: #{tpu_custom_call.1} parent=55 // pred_check
          %p638 = pneg %p207
        $region66: #{tpu_custom_call.1} parent=55 // pred_check_branch
          %640 = sbr.rel (%p638) target = $region68
        $region67: #{tpu_custom_call.1} parent=55 // pred_region
          %p641 = scmp.lt.s32.totalorder %s30, 1
          %s642 = scalar_select %p641, %s30, 1
          %s643 = scalar_lea.vmem %s6, %s642
        $region68: #{tpu_custom_call.1} parent=55 // pred_fallthru
          _
      $region56: #{tpu_custom_call.1} parent=5 // pred_fallthru
        _
    $region6: #{tpu_custom_call.1} parent=1 // loop_footer
      %s23 = sadd.s32 1, %s19
    $region7: #{tpu_custom_call.1} parent=1 // loop_footer_branch
      %18 = sbr.rel target = $region3
    $region8: #{tpu_custom_call.1} parent=1 // loop_exit
      _
    %644 = vsyncpa [#allocation3], 1
    %s645 = scalar_lea.sflag [#allocation3], 1
    %646 = vsyncpa %s645, 1
    %647 = vsyncpa [#allocation5], 1
    %s648 = scalar_lea.sflag [#allocation5], 1
    %649 = vsyncpa %s648, 1

</llo_original>
